<compile_context>
chip_gen: v7x
topology: tpu7x:2x2x1
jax: 0.10.0
libtpu: 0.0.40
codegen_flags: <defaults>
</compile_context>

<pallas_src>
import functools

import jax
import jax.numpy as jnp
from jax.experimental import pallas as pl
from jax.experimental.pallas import tpu as pltpu


# ----------------------------------------------------------------------------- helpers
def _pick_row_tile(m, cap=512):
    """Row tile for the hoisted matmuls: full array if small, else a mult-of-8 divisor."""
    if m <= cap:
        return m
    for t in range(cap, 7, -1):
        if m % t == 0 and t % 8 == 0:
            return t
    return m


def _pick_time_block(t, cap=32):
    """Number of RNN steps processed per grid iteration (must divide T)."""
    tb = min(t, cap)
    while t % tb != 0:
        tb -= 1
    return tb


# --------------------------------------------------------------------- dense projection
def _dense_kernel(x_ref, w_ref, b_ref, o_ref, *, activation):
    # bf16 MXU inputs, f32 accumulation, f32 bias/output.
    acc = jnp.dot(x_ref[...].astype(w_ref.dtype), w_ref[...],
                  preferred_element_type=jnp.float32) + b_ref[...]
    if activation == "sigmoid":
        acc = jax.nn.sigmoid(acc)
    o_ref[...] = acc.astype(o_ref.dtype)


def _dense(x2d, w, b2d, *, activation=None):
    """out = activation(x2d @ w + b2d); x2d: (M, K), w: (K, N), b2d: (1, N) -> (M, N) f32."""
    m, k = x2d.shape
    n = w.shape[-1]
    tm = _pick_row_tile(m)
    return pl.pallas_call(
        functools.partial(_dense_kernel, activation=activation),
        out_shape=jax.ShapeDtypeStruct((m, n), jnp.float32),
        grid_spec=pltpu.PrefetchScalarGridSpec(
            num_scalar_prefetch=0,
            grid=(m // tm,),
            in_specs=[
                pl.BlockSpec((tm, k), lambda i: (i, 0)),   # row tile of activations
                pl.BlockSpec((k, n), lambda i: (0, 0)),    # full weight (grid-invariant)
                pl.BlockSpec((1, n), lambda i: (0, 0)),    # bias row
            ],
            out_specs=pl.BlockSpec((tm, n), lambda i: (i, 0)),
        ),
        compiler_params=pltpu.CompilerParams(
            dimension_semantics=("parallel",),
        ),
    )(x2d, w, b2d)


# ------------------------------------------------------------------------- recurrence
def rnn_recurrence_kernel(xw_ref, h0_ref, whh_ref, hall_ref, hfin_ref, h_scratch):
    tb = pl.program_id(0)

    # Initialize the recurrent state from hidden0 on the first time block.
    @pl.when(tb == 0)
    def _():
        h_scratch[...] = h0_ref[...]

    num_steps = xw_ref.shape[0]          # Tb (static)
    w_hh = whh_ref[...]                  # hoist weight load out of the unrolled loop

    def step(i, h):
        # h_t = tanh(xw[t] + h_{t-1} @ W_hh^T); bf16 MXU inputs, f32 accumulate/state.
        pre = xw_ref[i] + jnp.dot(h.astype(w_hh.dtype), w_hh,
                                  preferred_element_type=jnp.float32)
        h_new = jnp.tanh(pre)
        hall_ref[i] = h_new
        return h_new

    h_last = jax.lax.fori_loop(0, num_steps, step, h_scratch[...], unroll=True)
    h_scratch[...] = h_last

    # Final hidden state: output block index is constant -> resident in VMEM,
    # written back to HBM once after the last grid step.
    @pl.when(tb == pl.num_programs(0) - 1)
    def _():
        hfin_ref[...] = h_last


# ----------------------------------------------------------------------------- forward
def vanilla_rnn_forward(x, h0, w_ih_t, w_hh_t, b_ih, b_hh, w_y_t, b_y,
                        compute_dtype=jnp.bfloat16):
    """x: (T, B, V); h0: (B, H). Returns (output (T*B, O), hidden (1, B, H), None)."""
    T, B, V = x.shape
    H = h0.shape[-1]
    O = w_y_t.shape[-1]

    # ---- Phase 1: hoisted input projection, biases pre-summed and folded in.
    bias_sum = (b_ih + b_hh).reshape(1, H).astype(jnp.float32)
    xw = _dense(x.reshape(T * B, V).astype(jnp.float32),
                w_ih_t.astype(compute_dtype), bias_sum).reshape(T, B, H)

    # ---- Phase 2: sequential recurrence, Tb steps per grid iteration.
    Tb = _pick_time_block(T)
    h_all, h_fin = pl.pallas_call(
        rnn_recurrence_kernel,
        out_shape=(
            jax.ShapeDtypeStruct((T, B, H), jnp.float32),
            jax.ShapeDtypeStruct((B, H), jnp.float32),
        ),
        grid_spec=pltpu.PrefetchScalarGridSpec(
            num_scalar_prefetch=0,
            grid=(T // Tb,),
            in_specs=[
                pl.BlockSpec((Tb, B, H), lambda t: (t, 0, 0)),  # xw time block
                pl.BlockSpec((B, H), lambda t: (0, 0)),         # h0
                pl.BlockSpec((H, H), lambda t: (0, 0)),         # W_hh^T (bf16)
            ],
            out_specs=(
                pl.BlockSpec((Tb, B, H), lambda t: (t, 0, 0)),  # all hidden states
                pl.BlockSpec((B, H), lambda t: (0, 0)),         # final hidden
            ),
            scratch_shapes=[pltpu.VMEM((B, H), jnp.float32)],
        ),
        compiler_params=pltpu.CompilerParams(
            # Time recurrence is strictly sequential: never mark this axis parallel.
            dimension_semantics=("arbitrary",),
        ),
    )(xw, h0.astype(jnp.float32), w_hh_t.astype(compute_dtype))

    # ---- Phase 3: hoisted output projection + sigmoid, one big matmul.
    out = _dense(h_all.reshape(T * B, H), w_y_t.astype(compute_dtype),
                 b_y.reshape(1, O).astype(jnp.float32), activation="sigmoid")

    output = out                          # .view(-1, output_size)
    hidden = h_fin.reshape(1, B, H)       # (n_layers=1, B, H)
    return output, hidden, None           # stack passthrough (None)


# ---------------------------------------------------------------------------- reference
def _reference(x, h0, w_ih_t, w_hh_t, b_ih, b_hh, w_y_t, b_y):
    T, B, V = x.shape
    H = h0.shape[-1]
    h = h0
    hts = []
    for t in range(T):
        h = jnp.tanh(x[t] @ w_ih_t + b_ih + h @ w_hh_t + b_hh)
        hts.append(h)
    ht = jnp.stack(hts, axis=0)
    out = jax.nn.sigmoid(ht @ w_y_t + b_y).reshape(-1, w_y_t.shape[-1])
    return out, h.reshape(1, B, H)


if __name__ == "__main__":
    # Small, module-consistent shapes
    T, B = 8, 2            # seq len, batch
    V = 16                 # vocab_size (RNN input size)
    H = 32                 # hidden_dim
    O = 8                  # output_size

    key = jax.random.PRNGKey(0)
    ks = jax.random.split(key, 8)
    scale = 0.1
    x = jax.random.normal(ks[0], (T, B, V), jnp.float32)
    h0 = jnp.zeros((B, H), jnp.float32)                             # initHidden analogue
    w_ih_t = scale * jax.random.normal(ks[1], (V, H), jnp.float32)  # (H,V)^T
    w_hh_t = scale * jax.random.normal(ks[2], (H, H), jnp.float32)  # (H,H)^T
    b_ih = scale * jax.random.normal(ks[3], (H,), jnp.float32)
    b_hh = scale * jax.random.normal(ks[4], (H,), jnp.float32)
    w_y_t = scale * jax.random.normal(ks[5], (H, O), jnp.float32)   # (O,H)^T
    b_y = scale * jax.random.normal(ks[6], (O,), jnp.float32)

    fwd = jax.jit(vanilla_rnn_forward)
    output, hidden, stack = fwd(x, h0, w_ih_t, w_hh_t, b_ih, b_hh, w_y_t, b_y)
    jax.block_until_ready((output, hidden))

    ref_out, ref_hid = _reference(x, h0, w_ih_t, w_hh_t, b_ih, b_hh, w_y_t, b_y)
    assert output.shape == (T * B, O), output.shape
    assert hidden.shape == (1, B, H), hidden.shape
    # Tolerance loosened vs pure-f32 because MXU inputs are bf16 (f32 accumulation/state).
    assert jnp.allclose(output, ref_out, atol=2e-2, rtol=2e-2), \
        float(jnp.max(jnp.abs(output - ref_out)))
    assert jnp.allclose(hidden, ref_hid, atol=2e-2, rtol=2e-2), \
        float(jnp.max(jnp.abs(hidden - ref_hid)))
    print("KERNEL_OK")
</pallas_src>

<mosaic_0001>
module attributes {stable_mosaic.version = 11 : i64} {
  func.func @_dense_kernel(%arg0: i32, %arg1: memref<16x16xf32, #tpu.memory_space<vmem>>, %arg2: memref<16x32xbf16, #tpu.memory_space<vmem>>, %arg3: memref<1x32xf32, #tpu.memory_space<vmem>>, %arg4: memref<16x32xf32, #tpu.memory_space<vmem>>) attributes {dimension_semantics = [#tpu.dimension_semantics<parallel>], iteration_bounds = array<i64: 1>, scalar_prefetch = 0 : i64, scratch_operands = 0 : i64, tpu.core_type = #tpu.core_type<tc>, window_params = [{transform_indices = @transform_0, window_bounds = array<i64: 16, 16>}, {pipeline_mode = #tpu.pipeline_mode<synchronous>, transform_indices = @transform_1, window_bounds = array<i64: 16, 32>}, {pipeline_mode = #tpu.pipeline_mode<synchronous>, transform_indices = @transform_2, window_bounds = array<i64: 1, 32>}, {transform_indices = @transform_3, window_bounds = array<i64: 16, 32>}]} {
    %c0 = arith.constant 0 : index
    %c0_0 = arith.constant 0 : index
    %0 = vector.load %arg1[%c0, %c0_0] : memref<16x16xf32, #tpu.memory_space<vmem>>, vector<16x16xf32>
    %1 = arith.truncf %0 : vector<16x16xf32> to vector<16x16xbf16>
    %c0_1 = arith.constant 0 : index
    %c0_2 = arith.constant 0 : index
    %2 = vector.load %arg2[%c0_1, %c0_2] : memref<16x32xbf16, #tpu.memory_space<vmem>>, vector<16x32xbf16>
    %cst = arith.constant dense<0.000000e+00> : vector<16x32xf32>
    %3 = tpu.matmul %1, %2, %cst {dimension_numbers = #tpu.dot_dimension_numbers<[1], [0], [0], [1], [0, 0, 1, 1], [], []>} : vector<16x16xbf16>, vector<16x32xbf16>, vector<16x32xf32> -> vector<16x32xf32>
    %c0_3 = arith.constant 0 : index
    %c0_4 = arith.constant 0 : index
    %4 = vector.load %arg3[%c0_3, %c0_4] : memref<1x32xf32, #tpu.memory_space<vmem>>, vector<1x32xf32>
    %5 = vector.broadcast %4 : vector<1x32xf32> to vector<16x32xf32>
    %6 = arith.addf %3, %5 : vector<16x32xf32>
    %c0_5 = arith.constant 0 : index
    %c0_6 = arith.constant 0 : index
    %7 = vector.load %arg4[%c0_5, %c0_6] : memref<16x32xf32, #tpu.memory_space<vmem>>, vector<16x32xf32>
    tpu.vector_store %arg4[%c0_5, %c0_6], %6 {strides = array<i32>} : memref<16x32xf32, #tpu.memory_space<vmem>>, vector<16x32xf32>,
    return
  }
  func.func @transform_0(%arg0: i32) -> (i32, i32) {
    %c0_i32 = arith.constant 0 : i32
    %c0_i32_0 = arith.constant 0 : i32
    return %arg0, %c0_i32 : i32, i32
  }
  func.func @transform_1(%arg0: i32) -> (i32, i32) {
    %c0_i32 = arith.constant 0 : i32
    %c0_i32_0 = arith.constant 0 : i32
    %c0_i32_1 = arith.constant 0 : i32
    return %c0_i32, %c0_i32_0 : i32, i32
  }
  func.func @transform_2(%arg0: i32) -> (i32, i32) {
    %c0_i32 = arith.constant 0 : i32
    %c0_i32_0 = arith.constant 0 : i32
    %c0_i32_1 = arith.constant 0 : i32
    return %c0_i32, %c0_i32_0 : i32, i32
  }
  func.func @transform_3(%arg0: i32) -> (i32, i32) {
    %c0_i32 = arith.constant 0 : i32
    %c0_i32_0 = arith.constant 0 : i32
    return %arg0, %c0_i32 : i32, i32
  }
}

module attributes {stable_mosaic.version = 11 : i64} {
  func.func @rnn_recurrence_kernel(%arg0: i32, %arg1: memref<8x2x32xf32, #tpu.memory_space<vmem>>, %arg2: memref<2x32xf32, #tpu.memory_space<vmem>>, %arg3: memref<32x32xbf16, #tpu.memory_space<vmem>>, %arg4: memref<8x2x32xf32, #tpu.memory_space<vmem>>, %arg5: memref<2x32xf32, #tpu.memory_space<vmem>>, %arg6: memref<2x32xf32, #tpu.memory_space<vmem>>) attributes {dimension_semantics = [#tpu.dimension_semantics<arbitrary>], iteration_bounds = array<i64: 1>, scalar_prefetch = 0 : i64, scratch_operands = 1 : i64, tpu.core_type = #tpu.core_type<tc>, window_params = [{transform_indices = @transform_0, window_bounds = array<i64: 8, 2, 32>}, {pipeline_mode = #tpu.pipeline_mode<synchronous>, transform_indices = @transform_1, window_bounds = array<i64: 2, 32>}, {pipeline_mode = #tpu.pipeline_mode<synchronous>, transform_indices = @transform_2, window_bounds = array<i64: 32, 32>}, {transform_indices = @transform_3, window_bounds = array<i64: 8, 2, 32>}, {pipeline_mode = #tpu.pipeline_mode<synchronous>, transform_indices = @transform_4, window_bounds = array<i64: 2, 32>}]} {
    %c0_i32 = arith.constant 0 : i32
    %0 = arith.cmpi eq, %arg0, %c0_i32 : i32
    %1 = arith.extui %0 : i1 to i32
    %c0_i32_0 = arith.constant 0 : i32
    %2 = arith.cmpi ne, %1, %c0_i32_0 : i32
    scf.if %2 {
      %c0_48 = arith.constant 0 : index
      %c0_49 = arith.constant 0 : index
      %97 = vector.load %arg2[%c0_48, %c0_49] : memref<2x32xf32, #tpu.memory_space<vmem>>, vector<2x32xf32>
      %c0_50 = arith.constant 0 : index
      %c0_51 = arith.constant 0 : index
      %98 = vector.load %arg6[%c0_50, %c0_51] : memref<2x32xf32, #tpu.memory_space<vmem>>, vector<2x32xf32>
      tpu.vector_store %arg6[%c0_50, %c0_51], %97 {strides = array<i32>} : memref<2x32xf32, #tpu.memory_space<vmem>>, vector<2x32xf32>,
    } else {
    }
    %c0 = arith.constant 0 : index
    %c0_1 = arith.constant 0 : index
    %3 = vector.load %arg3[%c0, %c0_1] : memref<32x32xbf16, #tpu.memory_space<vmem>>, vector<32x32xbf16>
    %c0_2 = arith.constant 0 : index
    %c0_3 = arith.constant 0 : index
    %4 = vector.load %arg6[%c0_2, %c0_3] : memref<2x32xf32, #tpu.memory_space<vmem>>, vector<2x32xf32>
    %c0_i32_4 = arith.constant 0 : i32
    %5 = arith.index_cast %c0_i32_4 : i32 to index
    %c0_5 = arith.constant 0 : index
    %c0_6 = arith.constant 0 : index
    %6 = vector.load %arg1[%5, %c0_5, %c0_6] : memref<8x2x32xf32, #tpu.memory_space<vmem>>, vector<1x2x32xf32>
    %7 = vector.shape_cast %6 : vector<1x2x32xf32> to vector<2x32xf32>
    %8 = arith.truncf %4 : vector<2x32xf32> to vector<2x32xbf16>
    %cst = arith.constant dense<0.000000e+00> : vector<2x32xf32>
    %9 = tpu.matmul %8, %3, %cst {dimension_numbers = #tpu.dot_dimension_numbers<[1], [0], [0], [1], [0, 0, 1, 1], [], []>} : vector<2x32xbf16>, vector<32x32xbf16>, vector<2x32xf32> -> vector<2x32xf32>
    %10 = arith.addf %7, %9 : vector<2x32xf32>
    %11 = math.tanh %10 : vector<2x32xf32>
    %12 = arith.index_cast %c0_i32_4 : i32 to index
    %c0_7 = arith.constant 0 : index
    %c0_8 = arith.constant 0 : index
    %13 = vector.load %arg4[%12, %c0_7, %c0_8] : memref<8x2x32xf32, #tpu.memory_space<vmem>>, vector<1x2x32xf32>
    %14 = vector.shape_cast %13 : vector<1x2x32xf32> to vector<2x32xf32>
    %15 = vector.shape_cast %11 : vector<2x32xf32> to vector<1x2x32xf32>
    tpu.vector_store %arg4[%12, %c0_7, %c0_8], %15 {strides = array<i32>} : memref<8x2x32xf32, #tpu.memory_space<vmem>>, vector<1x2x32xf32>,
    %c1_i32 = arith.constant 1 : i32
    %16 = arith.index_cast %c1_i32 : i32 to index
    %c0_9 = arith.constant 0 : index
    %c0_10 = arith.constant 0 : index
    %17 = vector.load %arg1[%16, %c0_9, %c0_10] : memref<8x2x32xf32, #tpu.memory_space<vmem>>, vector<1x2x32xf32>
    %18 = vector.shape_cast %17 : vector<1x2x32xf32> to vector<2x32xf32>
    %19 = arith.truncf %11 : vector<2x32xf32> to vector<2x32xbf16>
    %cst_11 = arith.constant dense<0.000000e+00> : vector<2x32xf32>
    %20 = tpu.matmul %19, %3, %cst_11 {dimension_numbers = #tpu.dot_dimension_numbers<[1], [0], [0], [1], [0, 0, 1, 1], [], []>} : vector<2x32xbf16>, vector<32x32xbf16>, vector<2x32xf32> -> vector<2x32xf32>
    %21 = arith.addf %18, %20 : vector<2x32xf32>
    %22 = math.tanh %21 : vector<2x32xf32>
    %23 = arith.index_cast %c1_i32 : i32 to index
    %c0_12 = arith.constant 0 : index
    %c0_13 = arith.constant 0 : index
    %24 = vector.load %arg4[%23, %c0_12, %c0_13] : memref<8x2x32xf32, #tpu.memory_space<vmem>>, vector<1x2x32xf32>
    %25 = vector.shape_cast %24 : vector<1x2x32xf32> to vector<2x32xf32>
    %26 = vector.shape_cast %22 : vector<2x32xf32> to vector<1x2x32xf32>
    tpu.vector_store %arg4[%23, %c0_12, %c0_13], %26 {strides = array<i32>} : memref<8x2x32xf32, #tpu.memory_space<vmem>>, vector<1x2x32xf32>,
    %c2_i32 = arith.constant 2 : i32
    %27 = arith.index_cast %c2_i32 : i32 to index
    %c0_14 = arith.constant 0 : index
    %c0_15 = arith.constant 0 : index
    %28 = vector.load %arg1[%27, %c0_14, %c0_15] : memref<8x2x32xf32, #tpu.memory_space<vmem>>, vector<1x2x32xf32>
    %29 = vector.shape_cast %28 : vector<1x2x32xf32> to vector<2x32xf32>
    %30 = arith.truncf %22 : vector<2x32xf32> to vector<2x32xbf16>
    %cst_16 = arith.constant dense<0.000000e+00> : vector<2x32xf32>
    %31 = tpu.matmul %30, %3, %cst_16 {dimension_numbers = #tpu.dot_dimension_numbers<[1], [0], [0], [1], [0, 0, 1, 1], [], []>} : vector<2x32xbf16>, vector<32x32xbf16>, vector<2x32xf32> -> vector<2x32xf32>
    %32 = arith.addf %29, %31 : vector<2x32xf32>
    %33 = math.tanh %32 : vector<2x32xf32>
    %34 = arith.index_cast %c2_i32 : i32 to index
    %c0_17 = arith.constant 0 : index
    %c0_18 = arith.constant 0 : index
    %35 = vector.load %arg4[%34, %c0_17, %c0_18] : memref<8x2x32xf32, #tpu.memory_space<vmem>>, vector<1x2x32xf32>
    %36 = vector.shape_cast %35 : vector<1x2x32xf32> to vector<2x32xf32>
    %37 = vector.shape_cast %33 : vector<2x32xf32> to vector<1x2x32xf32>
    tpu.vector_store %arg4[%34, %c0_17, %c0_18], %37 {strides = array<i32>} : memref<8x2x32xf32, #tpu.memory_space<vmem>>, vector<1x2x32xf32>,
    %c3_i32 = arith.constant 3 : i32
    %38 = arith.index_cast %c3_i32 : i32 to index
    %c0_19 = arith.constant 0 : index
    %c0_20 = arith.constant 0 : index
    %39 = vector.load %arg1[%38, %c0_19, %c0_20] : memref<8x2x32xf32, #tpu.memory_space<vmem>>, vector<1x2x32xf32>
    %40 = vector.shape_cast %39 : vector<1x2x32xf32> to vector<2x32xf32>
    %41 = arith.truncf %33 : vector<2x32xf32> to vector<2x32xbf16>
    %cst_21 = arith.constant dense<0.000000e+00> : vector<2x32xf32>
    %42 = tpu.matmul %41, %3, %cst_21 {dimension_numbers = #tpu.dot_dimension_numbers<[1], [0], [0], [1], [0, 0, 1, 1], [], []>} : vector<2x32xbf16>, vector<32x32xbf16>, vector<2x32xf32> -> vector<2x32xf32>
    %43 = arith.addf %40, %42 : vector<2x32xf32>
    %44 = math.tanh %43 : vector<2x32xf32>
    %45 = arith.index_cast %c3_i32 : i32 to index
    %c0_22 = arith.constant 0 : index
    %c0_23 = arith.constant 0 : index
    %46 = vector.load %arg4[%45, %c0_22, %c0_23] : memref<8x2x32xf32, #tpu.memory_space<vmem>>, vector<1x2x32xf32>
    %47 = vector.shape_cast %46 : vector<1x2x32xf32> to vector<2x32xf32>
    %48 = vector.shape_cast %44 : vector<2x32xf32> to vector<1x2x32xf32>
    tpu.vector_store %arg4[%45, %c0_22, %c0_23], %48 {strides = array<i32>} : memref<8x2x32xf32, #tpu.memory_space<vmem>>, vector<1x2x32xf32>,
    %c4_i32 = arith.constant 4 : i32
    %49 = arith.index_cast %c4_i32 : i32 to index
    %c0_24 = arith.constant 0 : index
    %c0_25 = arith.constant 0 : index
    %50 = vector.load %arg1[%49, %c0_24, %c0_25] : memref<8x2x32xf32, #tpu.memory_space<vmem>>, vector<1x2x32xf32>
    %51 = vector.shape_cast %50 : vector<1x2x32xf32> to vector<2x32xf32>
    %52 = arith.truncf %44 : vector<2x32xf32> to vector<2x32xbf16>
    %cst_26 = arith.constant dense<0.000000e+00> : vector<2x32xf32>
    %53 = tpu.matmul %52, %3, %cst_26 {dimension_numbers = #tpu.dot_dimension_numbers<[1], [0], [0], [1], [0, 0, 1, 1], [], []>} : vector<2x32xbf16>, vector<32x32xbf16>, vector<2x32xf32> -> vector<2x32xf32>
    %54 = arith.addf %51, %53 : vector<2x32xf32>
    %55 = math.tanh %54 : vector<2x32xf32>
    %56 = arith.index_cast %c4_i32 : i32 to index
    %c0_27 = arith.constant 0 : index
    %c0_28 = arith.constant 0 : index
    %57 = vector.load %arg4[%56, %c0_27, %c0_28] : memref<8x2x32xf32, #tpu.memory_space<vmem>>, vector<1x2x32xf32>
    %58 = vector.shape_cast %57 : vector<1x2x32xf32> to vector<2x32xf32>
    %59 = vector.shape_cast %55 : vector<2x32xf32> to vector<1x2x32xf32>
    tpu.vector_store %arg4[%56, %c0_27, %c0_28], %59 {strides = array<i32>} : memref<8x2x32xf32, #tpu.memory_space<vmem>>, vector<1x2x32xf32>,
    %c5_i32 = arith.constant 5 : i32
    %60 = arith.index_cast %c5_i32 : i32 to index
    %c0_29 = arith.constant 0 : index
    %c0_30 = arith.constant 0 : index
    %61 = vector.load %arg1[%60, %c0_29, %c0_30] : memref<8x2x32xf32, #tpu.memory_space<vmem>>, vector<1x2x32xf32>
    %62 = vector.shape_cast %61 : vector<1x2x32xf32> to vector<2x32xf32>
    %63 = arith.truncf %55 : vector<2x32xf32> to vector<2x32xbf16>
    %cst_31 = arith.constant dense<0.000000e+00> : vector<2x32xf32>
    %64 = tpu.matmul %63, %3, %cst_31 {dimension_numbers = #tpu.dot_dimension_numbers<[1], [0], [0], [1], [0, 0, 1, 1], [], []>} : vector<2x32xbf16>, vector<32x32xbf16>, vector<2x32xf32> -> vector<2x32xf32>
    %65 = arith.addf %62, %64 : vector<2x32xf32>
    %66 = math.tanh %65 : vector<2x32xf32>
    %67 = arith.index_cast %c5_i32 : i32 to index
    %c0_32 = arith.constant 0 : index
    %c0_33 = arith.constant 0 : index
    %68 = vector.load %arg4[%67, %c0_32, %c0_33] : memref<8x2x32xf32, #tpu.memory_space<vmem>>, vector<1x2x32xf32>
    %69 = vector.shape_cast %68 : vector<1x2x32xf32> to vector<2x32xf32>
    %70 = vector.shape_cast %66 : vector<2x32xf32> to vector<1x2x32xf32>
    tpu.vector_store %arg4[%67, %c0_32, %c0_33], %70 {strides = array<i32>} : memref<8x2x32xf32, #tpu.memory_space<vmem>>, vector<1x2x32xf32>,
    %c6_i32 = arith.constant 6 : i32
    %71 = arith.index_cast %c6_i32 : i32 to index
    %c0_34 = arith.constant 0 : index
    %c0_35 = arith.constant 0 : index
    %72 = vector.load %arg1[%71, %c0_34, %c0_35] : memref<8x2x32xf32, #tpu.memory_space<vmem>>, vector<1x2x32xf32>
    %73 = vector.shape_cast %72 : vector<1x2x32xf32> to vector<2x32xf32>
    %74 = arith.truncf %66 : vector<2x32xf32> to vector<2x32xbf16>
    %cst_36 = arith.constant dense<0.000000e+00> : vector<2x32xf32>
    %75 = tpu.matmul %74, %3, %cst_36 {dimension_numbers = #tpu.dot_dimension_numbers<[1], [0], [0], [1], [0, 0, 1, 1], [], []>} : vector<2x32xbf16>, vector<32x32xbf16>, vector<2x32xf32> -> vector<2x32xf32>
    %76 = arith.addf %73, %75 : vector<2x32xf32>
    %77 = math.tanh %76 : vector<2x32xf32>
    %78 = arith.index_cast %c6_i32 : i32 to index
    %c0_37 = arith.constant 0 : index
    %c0_38 = arith.constant 0 : index
    %79 = vector.load %arg4[%78, %c0_37, %c0_38] : memref<8x2x32xf32, #tpu.memory_space<vmem>>, vector<1x2x32xf32>
    %80 = vector.shape_cast %79 : vector<1x2x32xf32> to vector<2x32xf32>
    %81 = vector.shape_cast %77 : vector<2x32xf32> to vector<1x2x32xf32>
    tpu.vector_store %arg4[%78, %c0_37, %c0_38], %81 {strides = array<i32>} : memref<8x2x32xf32, #tpu.memory_space<vmem>>, vector<1x2x32xf32>,
    %c7_i32 = arith.constant 7 : i32
    %82 = arith.index_cast %c7_i32 : i32 to index
    %c0_39 = arith.constant 0 : index
    %c0_40 = arith.constant 0 : index
    %83 = vector.load %arg1[%82, %c0_39, %c0_40] : memref<8x2x32xf32, #tpu.memory_space<vmem>>, vector<1x2x32xf32>
    %84 = vector.shape_cast %83 : vector<1x2x32xf32> to vector<2x32xf32>
    %85 = arith.truncf %77 : vector<2x32xf32> to vector<2x32xbf16>
    %cst_41 = arith.constant dense<0.000000e+00> : vector<2x32xf32>
    %86 = tpu.matmul %85, %3, %cst_41 {dimension_numbers = #tpu.dot_dimension_numbers<[1], [0], [0], [1], [0, 0, 1, 1], [], []>} : vector<2x32xbf16>, vector<32x32xbf16>, vector<2x32xf32> -> vector<2x32xf32>
    %87 = arith.addf %84, %86 : vector<2x32xf32>
    %88 = math.tanh %87 : vector<2x32xf32>
    %89 = arith.index_cast %c7_i32 : i32 to index
    %c0_42 = arith.constant 0 : index
    %c0_43 = arith.constant 0 : index
    %90 = vector.load %arg4[%89, %c0_42, %c0_43] : memref<8x2x32xf32, #tpu.memory_space<vmem>>, vector<1x2x32xf32>
    %91 = vector.shape_cast %90 : vector<1x2x32xf32> to vector<2x32xf32>
    %92 = vector.shape_cast %88 : vector<2x32xf32> to vector<1x2x32xf32>
    tpu.vector_store %arg4[%89, %c0_42, %c0_43], %92 {strides = array<i32>} : memref<8x2x32xf32, #tpu.memory_space<vmem>>, vector<1x2x32xf32>,
    %c8_i32 = arith.constant 8 : i32
    %c0_44 = arith.constant 0 : index
    %c0_45 = arith.constant 0 : index
    %93 = vector.load %arg6[%c0_44, %c0_45] : memref<2x32xf32, #tpu.memory_space<vmem>>, vector<2x32xf32>
    tpu.vector_store %arg6[%c0_44, %c0_45], %88 {strides = array<i32>} : memref<2x32xf32, #tpu.memory_space<vmem>>, vector<2x32xf32>,
    %c0_i32_46 = arith.constant 0 : i32
    %94 = arith.cmpi eq, %arg0, %c0_i32_46 : i32
    %95 = arith.extui %94 : i1 to i32
    %c0_i32_47 = arith.constant 0 : i32
    %96 = arith.cmpi ne, %95, %c0_i32_47 : i32
    scf.if %96 {
      %c0_48 = arith.constant 0 : index
      %c0_49 = arith.constant 0 : index
      %97 = vector.load %arg5[%c0_48, %c0_49] : memref<2x32xf32, #tpu.memory_space<vmem>>, vector<2x32xf32>
      tpu.vector_store %arg5[%c0_48, %c0_49], %88 {strides = array<i32>} : memref<2x32xf32, #tpu.memory_space<vmem>>, vector<2x32xf32>,
    } else {
    }
    return
  }
  func.func @transform_0(%arg0: i32) -> (i32, i32, i32) {
    %c0_i32 = arith.constant 0 : i32
    %c0_i32_0 = arith.constant 0 : i32
    %c0_i32_1 = arith.constant 0 : i32
    return %arg0, %c0_i32, %c0_i32_0 : i32, i32, i32
  }
  func.func @transform_1(%arg0: i32) -> (i32, i32) {
    %c0_i32 = arith.constant 0 : i32
    %c0_i32_0 = arith.constant 0 : i32
    %c0_i32_1 = arith.constant 0 : i32
    return %c0_i32, %c0_i32_0 : i32, i32
  }
  func.func @transform_2(%arg0: i32) -> (i32, i32) {
    %c0_i32 = arith.constant 0 : i32
    %c0_i32_0 = arith.constant 0 : i32
    %c0_i32_1 = arith.constant 0 : i32
    return %c0_i32, %c0_i32_0 : i32, i32
  }
  func.func @transform_3(%arg0: i32) -> (i32, i32, i32) {
    %c0_i32 = arith.constant 0 : i32
    %c0_i32_0 = arith.constant 0 : i32
    %c0_i32_1 = arith.constant 0 : i32
    return %arg0, %c0_i32, %c0_i32_0 : i32, i32, i32
  }
  func.func @transform_4(%arg0: i32) -> (i32, i32) {
    %c0_i32 = arith.constant 0 : i32
    %c0_i32_0 = arith.constant 0 : i32
    %c0_i32_1 = arith.constant 0 : i32
    return %c0_i32, %c0_i32_0 : i32, i32
  }
}

module attributes {stable_mosaic.version = 11 : i64} {
  func.func @_dense_kernel(%arg0: i32, %arg1: memref<16x32xf32, #tpu.memory_space<vmem>>, %arg2: memref<32x8xbf16, #tpu.memory_space<vmem>>, %arg3: memref<1x8xf32, #tpu.memory_space<vmem>>, %arg4: memref<16x8xf32, #tpu.memory_space<vmem>>) attributes {dimension_semantics = [#tpu.dimension_semantics<parallel>], iteration_bounds = array<i64: 1>, scalar_prefetch = 0 : i64, scratch_operands = 0 : i64, tpu.core_type = #tpu.core_type<tc>, window_params = [{transform_indices = @transform_0, window_bounds = array<i64: 16, 32>}, {pipeline_mode = #tpu.pipeline_mode<synchronous>, transform_indices = @transform_1, window_bounds = array<i64: 32, 8>}, {pipeline_mode = #tpu.pipeline_mode<synchronous>, transform_indices = @transform_2, window_bounds = array<i64: 1, 8>}, {transform_indices = @transform_3, window_bounds = array<i64: 16, 8>}]} {
    %c0 = arith.constant 0 : index
    %c0_0 = arith.constant 0 : index
    %0 = vector.load %arg1[%c0, %c0_0] : memref<16x32xf32, #tpu.memory_space<vmem>>, vector<16x32xf32>
    %1 = arith.truncf %0 : vector<16x32xf32> to vector<16x32xbf16>
    %c0_1 = arith.constant 0 : index
    %c0_2 = arith.constant 0 : index
    %2 = vector.load %arg2[%c0_1, %c0_2] : memref<32x8xbf16, #tpu.memory_space<vmem>>, vector<32x8xbf16>
    %cst = arith.constant dense<0.000000e+00> : vector<16x8xf32>
    %3 = tpu.matmul %1, %2, %cst {dimension_numbers = #tpu.dot_dimension_numbers<[1], [0], [0], [1], [0, 0, 1, 1], [], []>} : vector<16x32xbf16>, vector<32x8xbf16>, vector<16x8xf32> -> vector<16x8xf32>
    %c0_3 = arith.constant 0 : index
    %c0_4 = arith.constant 0 : index
    %4 = vector.load %arg3[%c0_3, %c0_4] : memref<1x8xf32, #tpu.memory_space<vmem>>, vector<1x8xf32>
    %5 = vector.broadcast %4 : vector<1x8xf32> to vector<16x8xf32>
    %6 = arith.addf %3, %5 : vector<16x8xf32>
    %7 = arith.negf %6 : vector<16x8xf32>
    %8 = math.exp %7 : vector<16x8xf32>
    %cst_5 = arith.constant 1.000000e+00 : f32
    %9 = vector.broadcast %cst_5 : f32 to vector<16x8xf32>
    %10 = arith.addf %9, %8 : vector<16x8xf32>
    %11 = arith.divf %9, %10 : vector<16x8xf32>
    %c0_6 = arith.constant 0 : index
    %c0_7 = arith.constant 0 : index
    %12 = vector.load %arg4[%c0_6, %c0_7] : memref<16x8xf32, #tpu.memory_space<vmem>>, vector<16x8xf32>
    tpu.vector_store %arg4[%c0_6, %c0_7], %11 {strides = array<i32>} : memref<16x8xf32, #tpu.memory_space<vmem>>, vector<16x8xf32>,
    return
  }
  func.func @transform_0(%arg0: i32) -> (i32, i32) {
    %c0_i32 = arith.constant 0 : i32
    %c0_i32_0 = arith.constant 0 : i32
    return %arg0, %c0_i32 : i32, i32
  }
  func.func @transform_1(%arg0: i32) -> (i32, i32) {
    %c0_i32 = arith.constant 0 : i32
    %c0_i32_0 = arith.constant 0 : i32
    %c0_i32_1 = arith.constant 0 : i32
    return %c0_i32, %c0_i32_0 : i32, i32
  }
  func.func @transform_2(%arg0: i32) -> (i32, i32) {
    %c0_i32 = arith.constant 0 : i32
    %c0_i32_0 = arith.constant 0 : i32
    %c0_i32_1 = arith.constant 0 : i32
    return %c0_i32, %c0_i32_0 : i32, i32
  }
  func.func @transform_3(%arg0: i32) -> (i32, i32) {
    %c0_i32 = arith.constant 0 : i32
    %c0_i32_0 = arith.constant 0 : i32
    return %arg0, %c0_i32 : i32, i32
  }
}

</mosaic_0001>

<llo_original>
// kernel: vanilla_rnn_forward.3
$region0: #{vanilla_rnn_forward.3}
  #allocation0 [shape = 'u32[]', space=smem, size = 0x4, offset = 0x4, fixed_abs, tag = 'smem constant byte address 0x4 - core index']
  #allocation1 [shape = 'u32[144,128]{1,0:T(1,128)}', space=vmem, size = 0x12000, scoped, tag = 'internal scratch']
  %s0 = inlined_call_operand.vmem [shape: f32[16,16], index: 0, kind: input, shape index: {}]
  %s1 = inlined_call_operand.vmem [shape: bf16[16,32], index: 1, kind: input, shape index: {}]
  %s2 = inlined_call_operand.vmem [shape: f32[1,32], index: 2, kind: input, shape index: {}]
  %s3 = inlined_call_operand.vmem [shape: f32[16,32], index: 3, kind: output, shape index: {}]
  %s4 = sld [smem:[#allocation0]]
  $region22: #{vanilla_rnn_forward.3} parent=0
    _
  %s6 = ssub.s32 1, %s4
  %s7 = scalar_select 0, %s6, %s4
  // Predicated region
  $region2: #{vanilla_rnn_forward.3} parent=0 // pred_check
    _
  $region3: #{vanilla_rnn_forward.3} parent=0 // pred_check_branch
    %9 = sbr.rel (0) target = $region5
  $region4: #{vanilla_rnn_forward.3} parent=0 // pred_region
    _
  $region5: #{vanilla_rnn_forward.3} parent=0 // pred_fallthru
    _
  // Predicated region
  $region6: #{vanilla_rnn_forward.3} parent=0 // pred_check
    _
  $region7: #{vanilla_rnn_forward.3} parent=0 // pred_check_branch
    %11 = sbr.rel (0) target = $region9
  $region8: #{vanilla_rnn_forward.3} parent=0 // pred_region
    _
  $region9: #{vanilla_rnn_forward.3} parent=0 // pred_fallthru
    _
  // Predicated region
  $region10: #{vanilla_rnn_forward.3} parent=0 // pred_check
    _
  $region11: #{vanilla_rnn_forward.3} parent=0 // pred_check_branch
    %13 = sbr.rel (0) target = $region13
  $region12: #{vanilla_rnn_forward.3} parent=0 // pred_region
    _
  $region13: #{vanilla_rnn_forward.3} parent=0 // pred_fallthru
    _
  %v15 = vld [vmem:[%s0] sm:$0xff]
  %v16 = vld [vmem:[%s0 + $0x8] sm:$0xff]
  %v17 = vpack.c.bf16 %v16, %v15
  %v18 = vld [vmem:[%s1] sm:$0xf]
  %v19 = vld [vmem:[%s1 + $0x4] sm:$0xf]
  %v20 = vld [vmem:[%s2] sm:$0x1]
  %v22 = vlaneseq
  %v23 = vshrl.u32 %v22, 7
  %v24 = vsub.s32 0, %v23
  %v25 = vrot.slane %v20, %v24
  %v29 = vunpack.c.l.b16 %v18
  %v30 = vunpack.c.l.b16 %v19
  %v31 = vpack.c.b16 %v30, %v29
  %vm33 = vcmask 130048
  %v35 = vsel %vm33, %v17, 0
  %37 = vmatprep.subr.bf16.mxu0 0
  %38 = vmatpush1.bf16.msra.mxu0 %v31
  %39 = vmatprep.subr.bf16.mxu0 0
  %40 = vmatpush1.bf16.msra.mxu0 0
  %41 = vmatprep.subr.bf16.mxu0 0
  %42 = vmatpush1.bf16.msra.mxu0 0
  %43 = vmatprep.subr.bf16.mxu0 0
  %44 = vmatpush1.bf16.msra.mxu0 0
  %45 = vmatprep.subr.bf16.mxu0 0
  %46 = vmatpush1.bf16.msra.mxu0 0
  %47 = vmatprep.subr.bf16.mxu0 0
  %48 = vmatpush1.bf16.msra.mxu0 0
  %49 = vmatprep.subr.bf16.mxu0 0
  %50 = vmatpush1.bf16.msra.mxu0 0
  %51 = vmatprep.subr.bf16.mxu0 0
  %52 = vmatpush1.bf16.msra.mxu0 0
  %53 = vmatprep.subr.bf16.mxu0 0
  %54 = vmatpush1.bf16.msra.mxu0 0
  %55 = vmatprep.subr.bf16.mxu0 0
  %56 = vmatpush1.bf16.msra.mxu0 0
  %57 = vmatprep.subr.bf16.mxu0 0
  %58 = vmatpush1.bf16.msra.mxu0 0
  %59 = vmatprep.subr.bf16.mxu0 0
  %60 = vmatpush1.bf16.msra.mxu0 0
  %61 = vmatprep.subr.bf16.mxu0 0
  %62 = vmatpush1.bf16.msra.mxu0 0
  %63 = vmatprep.subr.bf16.mxu0 0
  %64 = vmatpush1.bf16.msra.mxu0 0
  %65 = vmatprep.subr.bf16.mxu0 0
  %66 = vmatpush1.bf16.msra.mxu0 0
  %67 = vmatprep.subr.bf16.mxu0 0
  %68 = vmatpush1.bf16.msra.mxu0 0
  %69 = vmatprep.mubr.bf16.mxu0 0
  %70 = vmatmul.mubr.bf16.gmra.mrb[0].mxu0 %v35
  %v71 = vpop.f32.mrb[0].mxu0
  %v72 = vadd.f32 %v25, %v71
  %v73 = vpop.f32.mrb[0].mxu0
  %v74 = vpop.f32.mrb[0].mxu0
  %v75 = vadd.f32 %v25, %v74
  %v76 = vpop.f32.mrb[0].mxu0
  %77 = vdwg.mxu0
  %vm78 = vcmask 261120
  %79 = vst.msk [vmem:[%s3] sm:$0xff] %vm78, %v72
  %80 = vst.msk [vmem:[%s3 + $0x8] sm:$0xff] %vm78, %v75
  // Predicated region
  $region14: #{vanilla_rnn_forward.3} parent=0 // pred_check
    _
  $region15: #{vanilla_rnn_forward.3} parent=0 // pred_check_branch
    %82 = sbr.rel (0) target = $region17
  $region16: #{vanilla_rnn_forward.3} parent=0 // pred_region
    _
  $region17: #{vanilla_rnn_forward.3} parent=0 // pred_fallthru
    _
  // Predicated region
  $region18: #{vanilla_rnn_forward.3} parent=0 // pred_check
    _
  $region19: #{vanilla_rnn_forward.3} parent=0 // pred_check_branch
    %84 = sbr.rel (0) target = $region21
  $region20: #{vanilla_rnn_forward.3} parent=0 // pred_region
    _
  $region21: #{vanilla_rnn_forward.3} parent=0 // pred_fallthru
    _

// kernel: vanilla_rnn_forward.5
$region0: #{vanilla_rnn_forward.5}
  #allocation0 [shape = 'u32[]', space=smem, size = 0x4, offset = 0x4, fixed_abs, tag = 'smem constant byte address 0x4 - core index']
  #allocation1 [shape = 'u32[144,128]{1,0:T(1,128)}', space=vmem, size = 0x12000, scoped, tag = 'internal scratch']
  %s0 = inlined_call_operand.vmem [shape: f32[16,32], index: 0, kind: input, shape index: {}]
  %s1 = inlined_call_operand.vmem [shape: bf16[32,8], index: 1, kind: input, shape index: {}]
  %s2 = inlined_call_operand.vmem [shape: f32[1,8], index: 2, kind: input, shape index: {}]
  %s3 = inlined_call_operand.vmem [shape: f32[16,8], index: 3, kind: output, shape index: {}]
  %s4 = sld [smem:[#allocation0]]
  $region22: #{vanilla_rnn_forward.5} parent=0
    _
  %s6 = ssub.s32 1, %s4
  %s7 = scalar_select 0, %s6, %s4
  // Predicated region
  $region2: #{vanilla_rnn_forward.5} parent=0 // pred_check
    _
  $region3: #{vanilla_rnn_forward.5} parent=0 // pred_check_branch
    %9 = sbr.rel (0) target = $region5
  $region4: #{vanilla_rnn_forward.5} parent=0 // pred_region
    _
  $region5: #{vanilla_rnn_forward.5} parent=0 // pred_fallthru
    _
  // Predicated region
  $region6: #{vanilla_rnn_forward.5} parent=0 // pred_check
    _
  $region7: #{vanilla_rnn_forward.5} parent=0 // pred_check_branch
    %11 = sbr.rel (0) target = $region9
  $region8: #{vanilla_rnn_forward.5} parent=0 // pred_region
    _
  $region9: #{vanilla_rnn_forward.5} parent=0 // pred_fallthru
    _
  // Predicated region
  $region10: #{vanilla_rnn_forward.5} parent=0 // pred_check
    _
  $region11: #{vanilla_rnn_forward.5} parent=0 // pred_check_branch
    %13 = sbr.rel (0) target = $region13
  $region12: #{vanilla_rnn_forward.5} parent=0 // pred_region
    _
  $region13: #{vanilla_rnn_forward.5} parent=0 // pred_fallthru
    _
  %v15 = vld [vmem:[%s0] sm:$0xff]
  %v16 = vld [vmem:[%s0 + $0x8] sm:$0xff]
  %v17 = vpack.c.bf16 %v16, %v15
  %v18 = vld [vmem:[%s1] sm:$0xf]
  %v19 = vld [vmem:[%s1 + $0x4] sm:$0xf]
  %v20 = vld [vmem:[%s1 + $0x8] sm:$0xf]
  %v21 = vld [vmem:[%s1 + $0xc] sm:$0xf]
  %v22 = vld [vmem:[%s2] sm:$0x1]
  %v24 = vlaneseq
  %v25 = vshrl.u32 %v24, 7
  %v26 = vsub.s32 0, %v25
  %v27 = vrot.slane %v22, %v26
  %v33 = vunpack.c.l.b16 %v18
  %v34 = vunpack.c.l.b16 %v19
  %v35 = vunpack.c.l.b16 %v20
  %v36 = vunpack.c.l.b16 %v21
  %v37 = vpack.c.b16 %v34, %v33
  %v38 = vpack.c.b16 %v36, %v35
  %vm41 = vcmask 261120
  %v43 = vsel %vm41, %v17, 0
  %45 = vmatprep.subr.bf16.mxu0 0
  %46 = vmatpush1.bf16.msra.mxu0 %v37
  %47 = vmatprep.subr.bf16.mxu0 0
  %48 = vmatpush1.bf16.msra.mxu0 %v38
  %49 = vmatprep.subr.bf16.mxu0 0
  %50 = vmatpush1.bf16.msra.mxu0 0
  %51 = vmatprep.subr.bf16.mxu0 0
  %52 = vmatpush1.bf16.msra.mxu0 0
  %53 = vmatprep.subr.bf16.mxu0 0
  %54 = vmatpush1.bf16.msra.mxu0 0
  %55 = vmatprep.subr.bf16.mxu0 0
  %56 = vmatpush1.bf16.msra.mxu0 0
  %57 = vmatprep.subr.bf16.mxu0 0
  %58 = vmatpush1.bf16.msra.mxu0 0
  %59 = vmatprep.subr.bf16.mxu0 0
  %60 = vmatpush1.bf16.msra.mxu0 0
  %61 = vmatprep.subr.bf16.mxu0 0
  %62 = vmatpush1.bf16.msra.mxu0 0
  %63 = vmatprep.subr.bf16.mxu0 0
  %64 = vmatpush1.bf16.msra.mxu0 0
  %65 = vmatprep.subr.bf16.mxu0 0
  %66 = vmatpush1.bf16.msra.mxu0 0
  %67 = vmatprep.subr.bf16.mxu0 0
  %68 = vmatpush1.bf16.msra.mxu0 0
  %69 = vmatprep.subr.bf16.mxu0 0
  %70 = vmatpush1.bf16.msra.mxu0 0
  %71 = vmatprep.subr.bf16.mxu0 0
  %72 = vmatpush1.bf16.msra.mxu0 0
  %73 = vmatprep.subr.bf16.mxu0 0
  %74 = vmatpush1.bf16.msra.mxu0 0
  %75 = vmatprep.subr.bf16.mxu0 0
  %76 = vmatpush1.bf16.msra.mxu0 0
  %77 = vmatprep.mubr.bf16.mxu0 0
  %78 = vmatmul.mubr.bf16.gmra.mrb[0].mxu0 %v43
  %v79 = vpop.f32.mrb[0].mxu0
  %v80 = vadd.f32 %v27, %v79
  %v81 = vpop.f32.mrb[0].mxu0
  %v82 = vpop.f32.mrb[0].mxu0
  %v83 = vadd.f32 %v27, %v82
  %v84 = vpop.f32.mrb[0].mxu0
  %85 = vdwg.mxu0
  %v86 = vxor.u32 %v80, 2147483648
  %v87 = vxor.u32 %v83, 2147483648
  %v88 = vmul.f32 %v86, 1.442695
  %v89 = vpow.pop %v88
  %v90 = vmul.f32 %v87, 1.442695
  %v91 = vpow.pop %v90
  %v92 = vadd.f32 %v89, 1.0
  %v93 = vadd.f32 %v91, 1.0
  %v94 = vrcp.pop %v92
  %v95 = vmul.f32 1.0, %v94
  %v96 = vrcp.pop %v93
  %v97 = vmul.f32 1.0, %v96
  %vm98 = vcmask 64512
  %99 = vst.msk [vmem:[%s3] sm:$0xff] %vm98, %v95
  %100 = vst.msk [vmem:[%s3 + $0x8] sm:$0xff] %vm98, %v97
  // Predicated region
  $region14: #{vanilla_rnn_forward.5} parent=0 // pred_check
    _
  $region15: #{vanilla_rnn_forward.5} parent=0 // pred_check_branch
    %102 = sbr.rel (0) target = $region17
  $region16: #{vanilla_rnn_forward.5} parent=0 // pred_region
    _
  $region17: #{vanilla_rnn_forward.5} parent=0 // pred_fallthru
    _
  // Predicated region
  $region18: #{vanilla_rnn_forward.5} parent=0 // pred_check
    _
  $region19: #{vanilla_rnn_forward.5} parent=0 // pred_check_branch
    %104 = sbr.rel (0) target = $region21
  $region20: #{vanilla_rnn_forward.5} parent=0 // pred_region
    _
  $region21: #{vanilla_rnn_forward.5} parent=0 // pred_fallthru
    _

// kernel: vanilla_rnn_forward.4
$region0: #{vanilla_rnn_forward.4}
  #allocation0 [shape = 'u32[]', space=smem, size = 0x4, offset = 0x4, fixed_abs, tag = 'smem constant byte address 0x4 - core index']
  #allocation1 [shape = 'u32[144,128]{1,0:T(1,128)}', space=vmem, size = 0x12000, scoped, tag = 'internal scratch']
  #allocation2 [shape = 'f32[2,32]{1,0:T(2,128)}', space=vmem, size = 0x400, scoped, tag = 'scratch operand']
  %s0 = inlined_call_operand.vmem [shape: f32[8,2,32], index: 0, kind: input, shape index: {}]
  %s1 = inlined_call_operand.vmem [shape: f32[2,32], index: 1, kind: input, shape index: {}]
  %s2 = inlined_call_operand.vmem [shape: bf16[32,32], index: 2, kind: input, shape index: {}]
  %s3 = inlined_call_operand.vmem [shape: f32[8,2,32], index: 3, kind: output, shape index: {0}]
  %s4 = inlined_call_operand.hbm [shape: f32[2,32], index: 4, kind: output, shape index: {1}]
  %5 = xla_tuple %s3, %s4
  %s6 = sld [smem:[#allocation0]]
  $region38: #{vanilla_rnn_forward.4} parent=0
    _
  %s8 = ssub.s32 1, %s6
  %s9 = scalar_select 0, %s8, %s6
  $region1: #{vanilla_rnn_forward.4} parent=0
    #allocation3 [shape = 'u8[1024]{0}', space=vmem, size = 0x400, scoped, tag = 'output window, operand 1, single buffered']
    #allocation4 [shape = 's32[1]{0}', space=sflag, size = 0x4, scoped, tag = 'scoped memory for vanilla_rnn_forward.4']
    %10 = vsyncpa [#allocation4], 0
    // Predicated region
    $region2: #{vanilla_rnn_forward.4} parent=1 // pred_check
      _
    $region3: #{vanilla_rnn_forward.4} parent=1 // pred_check_branch
      %12 = sbr.rel (0) target = $region5
    $region4: #{vanilla_rnn_forward.4} parent=1 // pred_region
      _
    $region5: #{vanilla_rnn_forward.4} parent=1 // pred_fallthru
      _
    // Predicated region
    $region6: #{vanilla_rnn_forward.4} parent=1 // pred_check
      _
    $region7: #{vanilla_rnn_forward.4} parent=1 // pred_check_branch
      %14 = sbr.rel (0) target = $region9
    $region8: #{vanilla_rnn_forward.4} parent=1 // pred_region
      _
    $region9: #{vanilla_rnn_forward.4} parent=1 // pred_fallthru
      _
    // Predicated region
    $region10: #{vanilla_rnn_forward.4} parent=1 // pred_check
      _
    $region11: #{vanilla_rnn_forward.4} parent=1 // pred_check_branch
      %16 = sbr.rel (0) target = $region13
    $region12: #{vanilla_rnn_forward.4} parent=1 // pred_region
      _
    $region13: #{vanilla_rnn_forward.4} parent=1 // pred_fallthru
      _
    %p18 = scmp.eq.s32.totalorder 0, 0
    // Predicated region
    $region14: #{vanilla_rnn_forward.4} parent=1 // pred_check
      %p19 = pneg %p18
    $region15: #{vanilla_rnn_forward.4} parent=1 // pred_check_branch
      %21 = sbr.rel (%p19) target = $region17
    $region16: #{vanilla_rnn_forward.4} parent=1 // pred_region
      %v22 = vld [vmem:[%s1] sm:$0x3]
      %vm23 = vcmask 254976
      %24 = vst.msk [vmem:[#allocation2] sm:$0x3] %vm23, %v22
    $region17: #{vanilla_rnn_forward.4} parent=1 // pred_fallthru
      _
    %v25 = vld [vmem:[%s2] sm:$0xf]
    %v26 = vld [vmem:[%s2 + $0x4] sm:$0xf]
    %v27 = vld [vmem:[%s2 + $0x8] sm:$0xf]
    %v28 = vld [vmem:[%s2 + $0xc] sm:$0xf]
    %v29 = vld [vmem:[#allocation2] sm:$0x3]
    %v30 = vld [vmem:[%s0] sm:$0x3]
    %v31 = vpack.c.bf16 %v29, %v29
    %v36 = vunpack.c.l.b16 %v25
    %v37 = vunpack.c.l.b16 %v26
    %v38 = vunpack.c.l.b16 %v27
    %v39 = vunpack.c.l.b16 %v28
    %v40 = vpack.c.b16 %v37, %v36
    %v41 = vpack.c.b16 %v39, %v38
    %vm44 = vcmask 261120
    %v46 = vsel %vm44, %v31, 0
    %48 = vmatprep.subr.bf16.mxu0 0
    %49 = vmatpush1.bf16.msra.mxu0 %v40
    %50 = vmatprep.subr.bf16.mxu0 0
    %51 = vmatpush1.bf16.msra.mxu0 %v41
    %52 = vmatprep.subr.bf16.mxu0 0
    %53 = vmatpush1.bf16.msra.mxu0 0
    %54 = vmatprep.subr.bf16.mxu0 0
    %55 = vmatpush1.bf16.msra.mxu0 0
    %56 = vmatprep.subr.bf16.mxu0 0
    %57 = vmatpush1.bf16.msra.mxu0 0
    %58 = vmatprep.subr.bf16.mxu0 0
    %59 = vmatpush1.bf16.msra.mxu0 0
    %60 = vmatprep.subr.bf16.mxu0 0
    %61 = vmatpush1.bf16.msra.mxu0 0
    %62 = vmatprep.subr.bf16.mxu0 0
    %63 = vmatpush1.bf16.msra.mxu0 0
    %64 = vmatprep.subr.bf16.mxu0 0
    %65 = vmatpush1.bf16.msra.mxu0 0
    %66 = vmatprep.subr.bf16.mxu0 0
    %67 = vmatpush1.bf16.msra.mxu0 0
    %68 = vmatprep.subr.bf16.mxu0 0
    %69 = vmatpush1.bf16.msra.mxu0 0
    %70 = vmatprep.subr.bf16.mxu0 0
    %71 = vmatpush1.bf16.msra.mxu0 0
    %72 = vmatprep.subr.bf16.mxu0 0
    %73 = vmatpush1.bf16.msra.mxu0 0
    %74 = vmatprep.subr.bf16.mxu0 0
    %75 = vmatpush1.bf16.msra.mxu0 0
    %76 = vmatprep.subr.bf16.mxu0 0
    %77 = vmatpush1.bf16.msra.mxu0 0
    %78 = vmatprep.subr.bf16.mxu0 0
    %79 = vmatpush1.bf16.msra.mxu0 0
    %80 = vmatprep.mubr.bf16.mxu0 0
    %81 = vmatmul.mubr.bf16.gmra.mrb[0].mxu0 %v46
    %v82 = vpop.f32.mrb[0].mxu0
    %v83 = vadd.f32 0.0, %v82
    %v84 = vpop.f32.mrb[0].mxu0
    %v85 = vpop.f32.mrb[0].mxu0
    %v86 = vpop.f32.mrb[0].mxu0
    %87 = vdwg.mxu0
    %v88 = vadd.f32 %v30, %v83
    %v89 = vtanh.pop %v88
    %vm90 = vcmask 254976
    %91 = vst.msk [vmem:[%s3] sm:$0x3] %vm90, %v89
    %s92 = scalar_lea.vmem %s0, 2
    %v93 = vld [vmem:[%s92] sm:$0x3]
    %v94 = vpack.c.bf16 %v89, %v89
    %v96 = vsel %vm44, %v94, 0
    %98 = vmatprep.subr.bf16.mxu0 0
    %99 = vmatpush1.bf16.msra.mxu0 %v40
    %100 = vmatprep.subr.bf16.mxu0 0
    %101 = vmatpush1.bf16.msra.mxu0 %v41
    %102 = vmatprep.subr.bf16.mxu0 0
    %103 = vmatpush1.bf16.msra.mxu0 0
    %104 = vmatprep.subr.bf16.mxu0 0
    %105 = vmatpush1.bf16.msra.mxu0 0
    %106 = vmatprep.subr.bf16.mxu0 0
    %107 = vmatpush1.bf16.msra.mxu0 0
    %108 = vmatprep.subr.bf16.mxu0 0
    %109 = vmatpush1.bf16.msra.mxu0 0
    %110 = vmatprep.subr.bf16.mxu0 0
    %111 = vmatpush1.bf16.msra.mxu0 0
    %112 = vmatprep.subr.bf16.mxu0 0
    %113 = vmatpush1.bf16.msra.mxu0 0
    %114 = vmatprep.subr.bf16.mxu0 0
    %115 = vmatpush1.bf16.msra.mxu0 0
    %116 = vmatprep.subr.bf16.mxu0 0
    %117 = vmatpush1.bf16.msra.mxu0 0
    %118 = vmatprep.subr.bf16.mxu0 0
    %119 = vmatpush1.bf16.msra.mxu0 0
    %120 = vmatprep.subr.bf16.mxu0 0
    %121 = vmatpush1.bf16.msra.mxu0 0
    %122 = vmatprep.subr.bf16.mxu0 0
    %123 = vmatpush1.bf16.msra.mxu0 0
    %124 = vmatprep.subr.bf16.mxu0 0
    %125 = vmatpush1.bf16.msra.mxu0 0
    %126 = vmatprep.subr.bf16.mxu0 0
    %127 = vmatpush1.bf16.msra.mxu0 0
    %128 = vmatprep.subr.bf16.mxu0 0
    %129 = vmatpush1.bf16.msra.mxu0 0
    %130 = vmatprep.mubr.bf16.mxu0 0
    %131 = vmatmul.mubr.bf16.gmra.mrb[0].mxu0 %v96
    %v132 = vpop.f32.mrb[0].mxu0
    %v133 = vadd.f32 0.0, %v132
    %v134 = vpop.f32.mrb[0].mxu0
    %v135 = vpop.f32.mrb[0].mxu0
    %v136 = vpop.f32.mrb[0].mxu0
    %137 = vdwg.mxu0
    %v138 = vadd.f32 %v93, %v133
    %v139 = vtanh.pop %v138
    %s140 = scalar_lea.vmem %s3, 2
    %141 = vst.msk [vmem:[%s140] sm:$0x3] %vm90, %v139
    %s142 = scalar_lea.vmem %s0, 4
    %v143 = vld [vmem:[%s142] sm:$0x3]
    %v144 = vpack.c.bf16 %v139, %v139
    %v146 = vsel %vm44, %v144, 0
    %148 = vmatprep.subr.bf16.mxu0 0
    %149 = vmatpush1.bf16.msra.mxu0 %v40
    %150 = vmatprep.subr.bf16.mxu0 0
    %151 = vmatpush1.bf16.msra.mxu0 %v41
    %152 = vmatprep.subr.bf16.mxu0 0
    %153 = vmatpush1.bf16.msra.mxu0 0
    %154 = vmatprep.subr.bf16.mxu0 0
    %155 = vmatpush1.bf16.msra.mxu0 0
    %156 = vmatprep.subr.bf16.mxu0 0
    %157 = vmatpush1.bf16.msra.mxu0 0
    %158 = vmatprep.subr.bf16.mxu0 0
    %159 = vmatpush1.bf16.msra.mxu0 0
    %160 = vmatprep.subr.bf16.mxu0 0
    %161 = vmatpush1.bf16.msra.mxu0 0
    %162 = vmatprep.subr.bf16.mxu0 0
    %163 = vmatpush1.bf16.msra.mxu0 0
    %164 = vmatprep.subr.bf16.mxu0 0
    %165 = vmatpush1.bf16.msra.mxu0 0
    %166 = vmatprep.subr.bf16.mxu0 0
    %167 = vmatpush1.bf16.msra.mxu0 0
    %168 = vmatprep.subr.bf16.mxu0 0
    %169 = vmatpush1.bf16.msra.mxu0 0
    %170 = vmatprep.subr.bf16.mxu0 0
    %171 = vmatpush1.bf16.msra.mxu0 0
    %172 = vmatprep.subr.bf16.mxu0 0
    %173 = vmatpush1.bf16.msra.mxu0 0
    %174 = vmatprep.subr.bf16.mxu0 0
    %175 = vmatpush1.bf16.msra.mxu0 0
    %176 = vmatprep.subr.bf16.mxu0 0
    %177 = vmatpush1.bf16.msra.mxu0 0
    %178 = vmatprep.subr.bf16.mxu0 0
    %179 = vmatpush1.bf16.msra.mxu0 0
    %180 = vmatprep.mubr.bf16.mxu0 0
    %181 = vmatmul.mubr.bf16.gmra.mrb[0].mxu0 %v146
    %v182 = vpop.f32.mrb[0].mxu0
    %v183 = vadd.f32 0.0, %v182
    %v184 = vpop.f32.mrb[0].mxu0
    %v185 = vpop.f32.mrb[0].mxu0
    %v186 = vpop.f32.mrb[0].mxu0
    %187 = vdwg.mxu0
    %v188 = vadd.f32 %v143, %v183
    %v189 = vtanh.pop %v188
    %s190 = scalar_lea.vmem %s3, 4
    %191 = vst.msk [vmem:[%s190] sm:$0x3] %vm90, %v189
    %s192 = scalar_lea.vmem %s0, 6
    %v193 = vld [vmem:[%s192] sm:$0x3]
    %v194 = vpack.c.bf16 %v189, %v189
    %v196 = vsel %vm44, %v194, 0
    %198 = vmatprep.subr.bf16.mxu0 0
    %199 = vmatpush1.bf16.msra.mxu0 %v40
    %200 = vmatprep.subr.bf16.mxu0 0
    %201 = vmatpush1.bf16.msra.mxu0 %v41
    %202 = vmatprep.subr.bf16.mxu0 0
    %203 = vmatpush1.bf16.msra.mxu0 0
    %204 = vmatprep.subr.bf16.mxu0 0
    %205 = vmatpush1.bf16.msra.mxu0 0
    %206 = vmatprep.subr.bf16.mxu0 0
    %207 = vmatpush1.bf16.msra.mxu0 0
    %208 = vmatprep.subr.bf16.mxu0 0
    %209 = vmatpush1.bf16.msra.mxu0 0
    %210 = vmatprep.subr.bf16.mxu0 0
    %211 = vmatpush1.bf16.msra.mxu0 0
    %212 = vmatprep.subr.bf16.mxu0 0
    %213 = vmatpush1.bf16.msra.mxu0 0
    %214 = vmatprep.subr.bf16.mxu0 0
    %215 = vmatpush1.bf16.msra.mxu0 0
    %216 = vmatprep.subr.bf16.mxu0 0
    %217 = vmatpush1.bf16.msra.mxu0 0
    %218 = vmatprep.subr.bf16.mxu0 0
    %219 = vmatpush1.bf16.msra.mxu0 0
    %220 = vmatprep.subr.bf16.mxu0 0
    %221 = vmatpush1.bf16.msra.mxu0 0
    %222 = vmatprep.subr.bf16.mxu0 0
    %223 = vmatpush1.bf16.msra.mxu0 0
    %224 = vmatprep.subr.bf16.mxu0 0
    %225 = vmatpush1.bf16.msra.mxu0 0
    %226 = vmatprep.subr.bf16.mxu0 0
    %227 = vmatpush1.bf16.msra.mxu0 0
    %228 = vmatprep.subr.bf16.mxu0 0
    %229 = vmatpush1.bf16.msra.mxu0 0
    %230 = vmatprep.mubr.bf16.mxu0 0
    %231 = vmatmul.mubr.bf16.gmra.mrb[0].mxu0 %v196
    %v232 = vpop.f32.mrb[0].mxu0
    %v233 = vadd.f32 0.0, %v232
    %v234 = vpop.f32.mrb[0].mxu0
    %v235 = vpop.f32.mrb[0].mxu0
    %v236 = vpop.f32.mrb[0].mxu0
    %237 = vdwg.mxu0
    %v238 = vadd.f32 %v193, %v233
    %v239 = vtanh.pop %v238
    %s240 = scalar_lea.vmem %s3, 6
    %241 = vst.msk [vmem:[%s240] sm:$0x3] %vm90, %v239
    %s242 = scalar_lea.vmem %s0, 8
    %v243 = vld [vmem:[%s242] sm:$0x3]
    %v244 = vpack.c.bf16 %v239, %v239
    %v246 = vsel %vm44, %v244, 0
    %248 = vmatprep.subr.bf16.mxu0 0
    %249 = vmatpush1.bf16.msra.mxu0 %v40
    %250 = vmatprep.subr.bf16.mxu0 0
    %251 = vmatpush1.bf16.msra.mxu0 %v41
    %252 = vmatprep.subr.bf16.mxu0 0
    %253 = vmatpush1.bf16.msra.mxu0 0
    %254 = vmatprep.subr.bf16.mxu0 0
    %255 = vmatpush1.bf16.msra.mxu0 0
    %256 = vmatprep.subr.bf16.mxu0 0
    %257 = vmatpush1.bf16.msra.mxu0 0
    %258 = vmatprep.subr.bf16.mxu0 0
    %259 = vmatpush1.bf16.msra.mxu0 0
    %260 = vmatprep.subr.bf16.mxu0 0
    %261 = vmatpush1.bf16.msra.mxu0 0
    %262 = vmatprep.subr.bf16.mxu0 0
    %263 = vmatpush1.bf16.msra.mxu0 0
    %264 = vmatprep.subr.bf16.mxu0 0
    %265 = vmatpush1.bf16.msra.mxu0 0
    %266 = vmatprep.subr.bf16.mxu0 0
    %267 = vmatpush1.bf16.msra.mxu0 0
    %268 = vmatprep.subr.bf16.mxu0 0
    %269 = vmatpush1.bf16.msra.mxu0 0
    %270 = vmatprep.subr.bf16.mxu0 0
    %271 = vmatpush1.bf16.msra.mxu0 0
    %272 = vmatprep.subr.bf16.mxu0 0
    %273 = vmatpush1.bf16.msra.mxu0 0
    %274 = vmatprep.subr.bf16.mxu0 0
    %275 = vmatpush1.bf16.msra.mxu0 0
    %276 = vmatprep.subr.bf16.mxu0 0
    %277 = vmatpush1.bf16.msra.mxu0 0
    %278 = vmatprep.subr.bf16.mxu0 0
    %279 = vmatpush1.bf16.msra.mxu0 0
    %280 = vmatprep.mubr.bf16.mxu0 0
    %281 = vmatmul.mubr.bf16.gmra.mrb[0].mxu0 %v246
    %v282 = vpop.f32.mrb[0].mxu0
    %v283 = vadd.f32 0.0, %v282
    %v284 = vpop.f32.mrb[0].mxu0
    %v285 = vpop.f32.mrb[0].mxu0
    %v286 = vpop.f32.mrb[0].mxu0
    %287 = vdwg.mxu0
    %v288 = vadd.f32 %v243, %v283
    %v289 = vtanh.pop %v288
    %s290 = scalar_lea.vmem %s3, 8
    %291 = vst.msk [vmem:[%s290] sm:$0x3] %vm90, %v289
    %s292 = scalar_lea.vmem %s0, 10
    %v293 = vld [vmem:[%s292] sm:$0x3]
    %v294 = vpack.c.bf16 %v289, %v289
    %v296 = vsel %vm44, %v294, 0
    %298 = vmatprep.subr.bf16.mxu0 0
    %299 = vmatpush1.bf16.msra.mxu0 %v40
    %300 = vmatprep.subr.bf16.mxu0 0
    %301 = vmatpush1.bf16.msra.mxu0 %v41
    %302 = vmatprep.subr.bf16.mxu0 0
    %303 = vmatpush1.bf16.msra.mxu0 0
    %304 = vmatprep.subr.bf16.mxu0 0
    %305 = vmatpush1.bf16.msra.mxu0 0
    %306 = vmatprep.subr.bf16.mxu0 0
    %307 = vmatpush1.bf16.msra.mxu0 0
    %308 = vmatprep.subr.bf16.mxu0 0
    %309 = vmatpush1.bf16.msra.mxu0 0
    %310 = vmatprep.subr.bf16.mxu0 0
    %311 = vmatpush1.bf16.msra.mxu0 0
    %312 = vmatprep.subr.bf16.mxu0 0
    %313 = vmatpush1.bf16.msra.mxu0 0
    %314 = vmatprep.subr.bf16.mxu0 0
    %315 = vmatpush1.bf16.msra.mxu0 0
    %316 = vmatprep.subr.bf16.mxu0 0
    %317 = vmatpush1.bf16.msra.mxu0 0
    %318 = vmatprep.subr.bf16.mxu0 0
    %319 = vmatpush1.bf16.msra.mxu0 0
    %320 = vmatprep.subr.bf16.mxu0 0
    %321 = vmatpush1.bf16.msra.mxu0 0
    %322 = vmatprep.subr.bf16.mxu0 0
    %323 = vmatpush1.bf16.msra.mxu0 0
    %324 = vmatprep.subr.bf16.mxu0 0
    %325 = vmatpush1.bf16.msra.mxu0 0
    %326 = vmatprep.subr.bf16.mxu0 0
    %327 = vmatpush1.bf16.msra.mxu0 0
    %328 = vmatprep.subr.bf16.mxu0 0
    %329 = vmatpush1.bf16.msra.mxu0 0
    %330 = vmatprep.mubr.bf16.mxu0 0
    %331 = vmatmul.mubr.bf16.gmra.mrb[0].mxu0 %v296
    %v332 = vpop.f32.mrb[0].mxu0
    %v333 = vadd.f32 0.0, %v332
    %v334 = vpop.f32.mrb[0].mxu0
    %v335 = vpop.f32.mrb[0].mxu0
    %v336 = vpop.f32.mrb[0].mxu0
    %337 = vdwg.mxu0
    %v338 = vadd.f32 %v293, %v333
    %v339 = vtanh.pop %v338
    %s340 = scalar_lea.vmem %s3, 10
    %341 = vst.msk [vmem:[%s340] sm:$0x3] %vm90, %v339
    %s342 = scalar_lea.vmem %s0, 12
    %v343 = vld [vmem:[%s342] sm:$0x3]
    %v344 = vpack.c.bf16 %v339, %v339
    %v346 = vsel %vm44, %v344, 0
    %348 = vmatprep.subr.bf16.mxu0 0
    %349 = vmatpush1.bf16.msra.mxu0 %v40
    %350 = vmatprep.subr.bf16.mxu0 0
    %351 = vmatpush1.bf16.msra.mxu0 %v41
    %352 = vmatprep.subr.bf16.mxu0 0
    %353 = vmatpush1.bf16.msra.mxu0 0
    %354 = vmatprep.subr.bf16.mxu0 0
    %355 = vmatpush1.bf16.msra.mxu0 0
    %356 = vmatprep.subr.bf16.mxu0 0
    %357 = vmatpush1.bf16.msra.mxu0 0
    %358 = vmatprep.subr.bf16.mxu0 0
    %359 = vmatpush1.bf16.msra.mxu0 0
    %360 = vmatprep.subr.bf16.mxu0 0
    %361 = vmatpush1.bf16.msra.mxu0 0
    %362 = vmatprep.subr.bf16.mxu0 0
    %363 = vmatpush1.bf16.msra.mxu0 0
    %364 = vmatprep.subr.bf16.mxu0 0
    %365 = vmatpush1.bf16.msra.mxu0 0
    %366 = vmatprep.subr.bf16.mxu0 0
    %367 = vmatpush1.bf16.msra.mxu0 0
    %368 = vmatprep.subr.bf16.mxu0 0
    %369 = vmatpush1.bf16.msra.mxu0 0
    %370 = vmatprep.subr.bf16.mxu0 0
    %371 = vmatpush1.bf16.msra.mxu0 0
    %372 = vmatprep.subr.bf16.mxu0 0
    %373 = vmatpush1.bf16.msra.mxu0 0
    %374 = vmatprep.subr.bf16.mxu0 0
    %375 = vmatpush1.bf16.msra.mxu0 0
    %376 = vmatprep.subr.bf16.mxu0 0
    %377 = vmatpush1.bf16.msra.mxu0 0
    %378 = vmatprep.subr.bf16.mxu0 0
    %379 = vmatpush1.bf16.msra.mxu0 0
    %380 = vmatprep.mubr.bf16.mxu0 0
    %381 = vmatmul.mubr.bf16.gmra.mrb[0].mxu0 %v346
    %v382 = vpop.f32.mrb[0].mxu0
    %v383 = vadd.f32 0.0, %v382
    %v384 = vpop.f32.mrb[0].mxu0
    %v385 = vpop.f32.mrb[0].mxu0
    %v386 = vpop.f32.mrb[0].mxu0
    %387 = vdwg.mxu0
    %v388 = vadd.f32 %v343, %v383
    %v389 = vtanh.pop %v388
    %s390 = scalar_lea.vmem %s3, 12
    %391 = vst.msk [vmem:[%s390] sm:$0x3] %vm90, %v389
    %s392 = scalar_lea.vmem %s0, 14
    %v393 = vld [vmem:[%s392] sm:$0x3]
    %v394 = vpack.c.bf16 %v389, %v389
    %v396 = vsel %vm44, %v394, 0
    %398 = vmatprep.subr.bf16.mxu0 0
    %399 = vmatpush1.bf16.msra.mxu0 %v40
    %400 = vmatprep.subr.bf16.mxu0 0
    %401 = vmatpush1.bf16.msra.mxu0 %v41
    %402 = vmatprep.subr.bf16.mxu0 0
    %403 = vmatpush1.bf16.msra.mxu0 0
    %404 = vmatprep.subr.bf16.mxu0 0
    %405 = vmatpush1.bf16.msra.mxu0 0
    %406 = vmatprep.subr.bf16.mxu0 0
    %407 = vmatpush1.bf16.msra.mxu0 0
    %408 = vmatprep.subr.bf16.mxu0 0
    %409 = vmatpush1.bf16.msra.mxu0 0
    %410 = vmatprep.subr.bf16.mxu0 0
    %411 = vmatpush1.bf16.msra.mxu0 0
    %412 = vmatprep.subr.bf16.mxu0 0
    %413 = vmatpush1.bf16.msra.mxu0 0
    %414 = vmatprep.subr.bf16.mxu0 0
    %415 = vmatpush1.bf16.msra.mxu0 0
    %416 = vmatprep.subr.bf16.mxu0 0
    %417 = vmatpush1.bf16.msra.mxu0 0
    %418 = vmatprep.subr.bf16.mxu0 0
    %419 = vmatpush1.bf16.msra.mxu0 0
    %420 = vmatprep.subr.bf16.mxu0 0
    %421 = vmatpush1.bf16.msra.mxu0 0
    %422 = vmatprep.subr.bf16.mxu0 0
    %423 = vmatpush1.bf16.msra.mxu0 0
    %424 = vmatprep.subr.bf16.mxu0 0
    %425 = vmatpush1.bf16.msra.mxu0 0
    %426 = vmatprep.subr.bf16.mxu0 0
    %427 = vmatpush1.bf16.msra.mxu0 0
    %428 = vmatprep.subr.bf16.mxu0 0
    %429 = vmatpush1.bf16.msra.mxu0 0
    %430 = vmatprep.mubr.bf16.mxu0 0
    %431 = vmatmul.mubr.bf16.gmra.mrb[0].mxu0 %v396
    %v432 = vpop.f32.mrb[0].mxu0
    %v433 = vadd.f32 0.0, %v432
    %v434 = vpop.f32.mrb[0].mxu0
    %v435 = vpop.f32.mrb[0].mxu0
    %v436 = vpop.f32.mrb[0].mxu0
    %437 = vdwg.mxu0
    %v438 = vadd.f32 %v393, %v433
    %v439 = vtanh.pop %v438
    %s440 = scalar_lea.vmem %s3, 14
    %441 = vst.msk [vmem:[%s440] sm:$0x3] %vm90, %v439
    %442 = vst.msk [vmem:[#allocation2] sm:$0x3] %vm90, %v439
    // Predicated region
    $region18: #{vanilla_rnn_forward.4} parent=1 // pred_check
      %p443 = pneg %p18
    $region19: #{vanilla_rnn_forward.4} parent=1 // pred_check_branch
      %445 = sbr.rel (%p443) target = $region21
    $region20: #{vanilla_rnn_forward.4} parent=1 // pred_region
      %446 = vst.msk [vmem:[#allocation3] sm:$0x3] %vm90, %v439
    $region21: #{vanilla_rnn_forward.4} parent=1 // pred_fallthru
      _
    // Predicated region
    $region22: #{vanilla_rnn_forward.4} parent=1 // pred_check
      _
    $region23: #{vanilla_rnn_forward.4} parent=1 // pred_check_branch
      %448 = sbr.rel (0) target = $region25
    $region24: #{vanilla_rnn_forward.4} parent=1 // pred_region
      _
    $region25: #{vanilla_rnn_forward.4} parent=1 // pred_fallthru
      _
    // Predicated region
    $region26: #{vanilla_rnn_forward.4} parent=1 // pred_check
      _
    $region27: #{vanilla_rnn_forward.4} parent=1 // pred_check_branch
      %450 = sbr.rel (0) target = $region29
    $region28: #{vanilla_rnn_forward.4} parent=1 // pred_region
      %s452 = ssub.s32 32, 32
      %453 = vsyncadd [#allocation4], %s452
      %s455 = sshll.u32 [#allocation3], 4
      %s456 = int_to_ptr.vmem [resolvable:$true] %s455
      %458 = dma.vmem_to_hbm [thread:$0]  %s456, 32, %s4, [#allocation4]
    $region29: #{vanilla_rnn_forward.4} parent=1 // pred_fallthru
      _
    // Predicated region
    $region30: #{vanilla_rnn_forward.4} parent=1 // pred_check
      _
    $region31: #{vanilla_rnn_forward.4} parent=1 // pred_check_branch
      %460 = sbr.rel (0) target = $region33
    $region32: #{vanilla_rnn_forward.4} parent=1 // pred_region
      _
    $region33: #{vanilla_rnn_forward.4} parent=1 // pred_fallthru
      _
    // Predicated region
    $region34: #{vanilla_rnn_forward.4} parent=1 // pred_check
      _
    $region35: #{vanilla_rnn_forward.4} parent=1 // pred_check_branch
      %462 = sbr.rel (0) target = $region37
    $region36: #{vanilla_rnn_forward.4} parent=1 // pred_region
      %463 = dma.done [#allocation4], 32
    $region37: #{vanilla_rnn_forward.4} parent=1 // pred_fallthru
      _
    %464 = vsyncpa [#allocation4], 1

</llo_original>
